<compile_context>
chip_gen: v6e
topology: v6e:2x2x1
jax: 0.10.0
libtpu: 0.0.40
codegen_flags: <defaults>
</compile_context>

<pallas_src>
import functools

import jax
import jax.numpy as jnp
from jax.experimental import pallas as pl
from jax.experimental.pallas import tpu as pltpu


# ----------------------------- kernels -------------------------------------


def _layer1_kernel(a_ref, p_ref, dinv_ref, b1_ref, w2_ref, o_ref, acc_ref, *,
                   tk, resident_p):
    """(row-tile, k-tile) step of layer 1 with the layer-2 projection fused.

    acc accumulates (A+I)[i,:] @ P1 over the k grid axis.  The finalize applies
    the symmetric normalization (dinv rows), bias, ReLU, then immediately
    projects by W2 and re-applies dinv, so the kernel output already IS the
    layer-2 operand P2 = dinv * (H @ W2); H never touches HBM.
    """
    k = pl.program_id(1)

    @pl.when(k == 0)
    def _():
        acc_ref[...] = jnp.zeros_like(acc_ref)

    if resident_p:
        ks = pl.multiple_of(k * tk, tk)
        p_tile = p_ref[pl.ds(ks, tk), :]           # slice resident VMEM copy
    else:
        p_tile = p_ref[...]                         # streamed k-tile fallback
    acc_ref[...] += jnp.dot(a_ref[...], p_tile, preferred_element_type=jnp.float32)

    @pl.when(k == pl.num_programs(1) - 1)
    def _():
        h = jnp.maximum(dinv_ref[...] * acc_ref[...] + b1_ref[...], 0.0)
        p2 = jnp.dot(h.astype(w2_ref.dtype), w2_ref[...],
                     preferred_element_type=jnp.float32)
        o_ref[...] = (dinv_ref[...] * p2).astype(o_ref.dtype)


def _layer2_kernel(a_ref, p_ref, dinv_ref, b2_ref, o_ref, *, tk, resident_p):
    """Layer-2 aggregation; accumulates directly into the resident f32 output."""
    k = pl.program_id(1)

    @pl.when(k == 0)
    def _():
        o_ref[...] = jnp.zeros_like(o_ref)

    if resident_p:
        ks = pl.multiple_of(k * tk, tk)
        p_tile = p_ref[pl.ds(ks, tk), :]
    else:
        p_tile = p_ref[...]
    o_ref[...] += jnp.dot(a_ref[...], p_tile, preferred_element_type=jnp.float32)

    @pl.when(k == pl.num_programs(1) - 1)
    def _():
        o_ref[...] = dinv_ref[...] * o_ref[...] + b2_ref[...]


# ----------------------------- planning ------------------------------------


def _round_up(x, m):
    return ((x + m - 1) // m) * m


def _pad2(x, rows, cols):
    return jnp.pad(x, ((0, rows - x.shape[0]), (0, cols - x.shape[1])))


def _pick_tm(n_pad):
    # Largest row strip that still leaves >= 2 row tiles (v7x megacore).
    for t in (512, 256, 128):
        if n_pad % t == 0 and n_pad // t >= 2:
            return t
    return 128                                     # n_pad == 128: single tile


def _pick_tk(n_pad):
    for t in (1024, 512, 256, 128):
        if n_pad % t == 0:
            return t
    return 128                                     # unreachable: n_pad % 128 == 0


_V5E_DEFAULT_SCOPED = 16 << 20     # smallest default scoped VMEM across gens
_RESIDENT_P_CEILING = 24 << 20     # leaves headroom on v7x's 64 MiB physical
_VMEM_CAP = 48 << 20               # never request more than this


def _plan(n_pad, c_max, tm, tk):
    """Decide resident-vs-streamed P and an explicit VMEM limit if needed."""
    p_res_bytes = 2 * n_pad * c_max * 2            # allow double-buffered copy
    resident = p_res_bytes <= _RESIDENT_P_CEILING
    p_bytes = p_res_bytes if resident else 2 * tk * c_max * 2
    work = (2 * tm * tk * 2            # double-buffered A tiles (bf16)
            + 3 * tm * c_max * 4       # accumulator + output buffers (f32)
            + c_max * c_max * 2        # resident W2 (bf16)
            + (1 << 20))               # slack
    total = work + p_bytes
    vmem_limit = None
    if total > _V5E_DEFAULT_SCOPED:
        vmem_limit = int(min(total + (4 << 20), _VMEM_CAP))
    return resident, vmem_limit


def _compiler_params(vmem_limit):
    kw = dict(dimension_semantics=("parallel", "arbitrary"))
    if vmem_limit is not None:
        kw["vmem_limit_bytes"] = vmem_limit
    return pltpu.CompilerParams(**kw)


# ----------------------------- wrappers ------------------------------------


def _layer1(a_p, p1_p, dinv_p, b1_p, w2_p, *, tm, tk, resident_p, vmem_limit):
    n_pad = a_p.shape[0]
    hid_p = p1_p.shape[1]
    out_p = w2_p.shape[1]
    if resident_p:
        p_spec = pl.BlockSpec((n_pad, hid_p), lambda i, k: (0, 0))   # resident
    else:
        p_spec = pl.BlockSpec((tk, hid_p), lambda i, k: (k, 0))      # streamed
    kernel = functools.partial(_layer1_kernel, tk=tk, resident_p=resident_p)
    return pl.pallas_call(
        kernel,
        out_shape=jax.ShapeDtypeStruct((n_pad, out_p), jnp.bfloat16),
        grid_spec=pltpu.PrefetchScalarGridSpec(
            num_scalar_prefetch=0,
            grid=(n_pad // tm, n_pad // tk),
            in_specs=[
                pl.BlockSpec((tm, tk), lambda i, k: (i, k)),       # (A+I) tile
                p_spec,                                            # P1
                pl.BlockSpec((tm, 1), lambda i, k: (i, 0)),        # dinv rows
                pl.BlockSpec((1, hid_p), lambda i, k: (0, 0)),     # b1
                pl.BlockSpec((hid_p, out_p), lambda i, k: (0, 0)), # W2 resident
            ],
            out_specs=pl.BlockSpec((tm, out_p), lambda i, k: (i, 0)),
            scratch_shapes=[pltpu.VMEM((tm, hid_p), jnp.float32)],
        ),
        compiler_params=_compiler_params(vmem_limit),
    )(a_p, p1_p, dinv_p, b1_p, w2_p)


def _layer2(a_p, p2_p, dinv_p, b2_p, *, tm, tk, resident_p, vmem_limit):
    n_pad = a_p.shape[0]
    out_p = p2_p.shape[1]
    if resident_p:
        p_spec = pl.BlockSpec((n_pad, out_p), lambda i, k: (0, 0))
    else:
        p_spec = pl.BlockSpec((tk, out_p), lambda i, k: (k, 0))
    kernel = functools.partial(_layer2_kernel, tk=tk, resident_p=resident_p)
    return pl.pallas_call(
        kernel,
        out_shape=jax.ShapeDtypeStruct((n_pad, out_p), jnp.float32),
        grid_spec=pltpu.PrefetchScalarGridSpec(
            num_scalar_prefetch=0,
            grid=(n_pad // tm, n_pad // tk),
            in_specs=[
                pl.BlockSpec((tm, tk), lambda i, k: (i, k)),       # (A+I) tile
                p_spec,                                            # P2
                pl.BlockSpec((tm, 1), lambda i, k: (i, 0)),        # dinv rows
                pl.BlockSpec((1, out_p), lambda i, k: (0, 0)),     # b2
            ],
            out_specs=pl.BlockSpec((tm, out_p), lambda i, k: (i, 0)),
        ),
        compiler_params=_compiler_params(vmem_limit),
    )(a_p, p2_p, dinv_p, b2_p)


def gcn_forward(a, dinv, x, w1, b1, w2, b2):
    """Full GCN forward. `a` = (A_noloops + I) with exact integer entries."""
    n, _ = x.shape
    hid_c = w1.shape[1]
    out_c = w2.shape[1]

    n_pad = _round_up(n, 128)
    hid_p = _round_up(hid_c, 128)
    out_p = _round_up(out_c, 128)

    # Dominant streamed operand: exact small integers -> bf16 is lossless.
    a_p = _pad2(a, n_pad, n_pad).astype(jnp.bfloat16)
    dinv_p = _pad2(dinv[:, None], n_pad, 1).astype(jnp.float32)

    # Tiny X@W1 projection in plain JAX (f32), pre-scaled by D^-1/2 rows so the
    # kernels only ever see exact-integer A.
    p1 = dinv[:, None] * (x @ w1)
    p1_p = _pad2(p1, n_pad, hid_p).astype(jnp.bfloat16)

    w2_p = _pad2(w2, hid_p, out_p).astype(jnp.bfloat16)
    b1_p = _pad2(b1.reshape(1, -1), 1, hid_p).astype(jnp.float32)
    b2_p = _pad2(b2.reshape(1, -1), 1, out_p).astype(jnp.float32)

    tm = _pick_tm(n_pad)
    tk = _pick_tk(n_pad)
    resident_p, vmem_limit = _plan(n_pad, max(hid_p, out_p), tm, tk)

    # Layer 1 (+ fused layer-2 projection): P2 = dinv * relu(dinv*(A+I)@P1 + b1) @ W2
    p2 = _layer1(a_p, p1_p, dinv_p, b1_p, w2_p, tm=tm, tk=tk,
                 resident_p=resident_p, vmem_limit=vmem_limit)
    # Layer 2: OUT = dinv * ((A+I) @ P2) + b2
    out = _layer2(a_p, p2, dinv_p, b2_p, tm=tm, tk=tk,
                  resident_p=resident_p, vmem_limit=vmem_limit)
    return out[:n, :out_c]


# ------------------------ graph preprocessing (plain JAX) -------------------


def build_graph(edge_index, num_nodes):
    """Dense (A_noloops + I) with exact integer entries plus D^-1/2.

    Matches PyG gcn_norm semantics: existing self-loops are dropped and
    replaced by a single unit self-loop per node; duplicate non-self-loop
    edges accumulate (scatter-add).  A_hat = dinv[:,None] * a * dinv[None,:].
    """
    src = edge_index[0]
    dst = edge_index[1]
    w = (src != dst).astype(jnp.float32)
    a = jnp.zeros((num_nodes, num_nodes), dtype=jnp.float32)
    a = a.at[dst, src].add(w)                              # A[target, source]
    a = a + jnp.eye(num_nodes, dtype=jnp.float32)          # one self-loop/node
    deg = a.sum(axis=1)
    dinv = jnp.where(deg > 0.0, jax.lax.rsqrt(deg), 0.0)
    return a, dinv


def glorot(key, shape):
    fan_in, fan_out = shape
    limit = jnp.sqrt(6.0 / (fan_in + fan_out))
    return jax.random.uniform(key, shape, jnp.float32, -limit, limit)


if __name__ == "__main__":
    # Small shapes: N=16 nodes, E=40 edges, in=8, hidden=32, out=8.
    N, E = 16, 40
    IN_C, HID_C, OUT_C = 8, 32, 8

    key = jax.random.PRNGKey(0)
    k_x, k_e, k_w1, k_w2 = jax.random.split(key, 4)

    x = jax.random.normal(k_x, (N, IN_C), dtype=jnp.float32)
    edge_index = jax.random.randint(k_e, (2, E), 0, N, dtype=jnp.int32)

    # Deterministic parameter init (GCNConv: glorot weights, zero bias).
    w1 = glorot(k_w1, (IN_C, HID_C))
    b1 = jnp.zeros((HID_C,), dtype=jnp.float32)
    w2 = glorot(k_w2, (HID_C, OUT_C))
    b2 = jnp.zeros((OUT_C,), dtype=jnp.float32)

    a, dinv = build_graph(edge_index, N)

    out = gcn_forward(a, dinv, x, w1, b1, w2, b2)
    jax.block_until_ready(out)

    # Pure-JAX f32 reference (kernel uses bf16 feature operands, f32 accum).
    a_hat = dinv[:, None] * a * dinv[None, :]
    ref = jnp.maximum(a_hat @ (x @ w1) + b1[None, :], 0.0)
    ref = a_hat @ (ref @ w2) + b2[None, :]

    assert out.shape == (N, OUT_C)
    max_err = float(jnp.max(jnp.abs(out - ref)))
    assert max_err < 0.1, f"max abs err {max_err}"

    print("KERNEL_OK")
</pallas_src>

<mosaic_0001>
module attributes {stable_mosaic.version = 11 : i64} {
  func.func @_layer1_kernel(%arg0: i32, %arg1: i32, %arg2: memref<128x128xbf16, #tpu.memory_space<vmem>>, %arg3: memref<128x128xbf16, #tpu.memory_space<vmem>>, %arg4: memref<128x1xf32, #tpu.memory_space<vmem>>, %arg5: memref<1x128xf32, #tpu.memory_space<vmem>>, %arg6: memref<128x128xbf16, #tpu.memory_space<vmem>>, %arg7: memref<128x128xbf16, #tpu.memory_space<vmem>>, %arg8: memref<128x128xf32, #tpu.memory_space<vmem>>) attributes {dimension_semantics = [#tpu.dimension_semantics<parallel>, #tpu.dimension_semantics<arbitrary>], iteration_bounds = array<i64: 1, 1>, scalar_prefetch = 0 : i64, scratch_operands = 1 : i64, tpu.core_type = #tpu.core_type<tc>, window_params = [{transform_indices = @transform_0, window_bounds = array<i64: 128, 128>}, {pipeline_mode = #tpu.pipeline_mode<synchronous>, transform_indices = @transform_1, window_bounds = array<i64: 128, 128>}, {transform_indices = @transform_2, window_bounds = array<i64: 128, 1>}, {pipeline_mode = #tpu.pipeline_mode<synchronous>, transform_indices = @transform_3, window_bounds = array<i64: 1, 128>}, {pipeline_mode = #tpu.pipeline_mode<synchronous>, transform_indices = @transform_4, window_bounds = array<i64: 128, 128>}, {transform_indices = @transform_5, window_bounds = array<i64: 128, 128>}]} {
    %c0_i32 = arith.constant 0 : i32
    %0 = arith.cmpi eq, %arg1, %c0_i32 : i32
    %1 = arith.extui %0 : i1 to i32
    %c0_i32_0 = arith.constant 0 : i32
    %2 = arith.cmpi ne, %1, %c0_i32_0 : i32
    scf.if %2 {
      %cst_9 = arith.constant 0.000000e+00 : f32
      %15 = vector.broadcast %cst_9 : f32 to vector<128x128xf32>
      %c0_10 = arith.constant 0 : index
      %c0_11 = arith.constant 0 : index
      %16 = vector.load %arg8[%c0_10, %c0_11] : memref<128x128xf32, #tpu.memory_space<vmem>>, vector<128x128xf32>
      tpu.vector_store %arg8[%c0_10, %c0_11], %15 {strides = array<i32>} : memref<128x128xf32, #tpu.memory_space<vmem>>, vector<128x128xf32>,
    } else {
    }
    %c128_i32 = arith.constant 128 : i32
    %3 = arith.muli %arg1, %c128_i32 : i32
    %4 = tpu.assume_multiple %3, 128 : i32
    %5 = arith.index_cast %4 : i32 to index
    %c0 = arith.constant 0 : index
    %6 = vector.load %arg3[%5, %c0] : memref<128x128xbf16, #tpu.memory_space<vmem>>, vector<128x128xbf16>
    %c0_1 = arith.constant 0 : index
    %c0_2 = arith.constant 0 : index
    %7 = vector.load %arg8[%c0_1, %c0_2] : memref<128x128xf32, #tpu.memory_space<vmem>>, vector<128x128xf32>
    %c0_3 = arith.constant 0 : index
    %c0_4 = arith.constant 0 : index
    %8 = vector.load %arg2[%c0_3, %c0_4] : memref<128x128xbf16, #tpu.memory_space<vmem>>, vector<128x128xbf16>
    %cst = arith.constant dense<0.000000e+00> : vector<128x128xf32>
    %9 = tpu.matmul %8, %6, %cst {dimension_numbers = #tpu.dot_dimension_numbers<[1], [0], [0], [1], [0, 0, 1, 1], [], []>} : vector<128x128xbf16>, vector<128x128xbf16>, vector<128x128xf32> -> vector<128x128xf32>
    %10 = arith.addf %7, %9 : vector<128x128xf32>
    %c0_5 = arith.constant 0 : index
    %c0_6 = arith.constant 0 : index
    %11 = vector.load %arg8[%c0_5, %c0_6] : memref<128x128xf32, #tpu.memory_space<vmem>>, vector<128x128xf32>
    tpu.vector_store %arg8[%c0_5, %c0_6], %10 {strides = array<i32>} : memref<128x128xf32, #tpu.memory_space<vmem>>, vector<128x128xf32>,
    %c0_i32_7 = arith.constant 0 : i32
    %12 = arith.cmpi eq, %arg1, %c0_i32_7 : i32
    %13 = arith.extui %12 : i1 to i32
    %c0_i32_8 = arith.constant 0 : i32
    %14 = arith.cmpi ne, %13, %c0_i32_8 : i32
    scf.if %14 {
      %c0_9 = arith.constant 0 : index
      %c0_10 = arith.constant 0 : index
      %15 = vector.load %arg4[%c0_9, %c0_10] : memref<128x1xf32, #tpu.memory_space<vmem>>, vector<128x1xf32>
      %c0_11 = arith.constant 0 : index
      %c0_12 = arith.constant 0 : index
      %16 = vector.load %arg8[%c0_11, %c0_12] : memref<128x128xf32, #tpu.memory_space<vmem>>, vector<128x128xf32>
      %17 = vector.broadcast %15 : vector<128x1xf32> to vector<128x128xf32>
      %18 = arith.mulf %17, %16 : vector<128x128xf32>
      %c0_13 = arith.constant 0 : index
      %c0_14 = arith.constant 0 : index
      %19 = vector.load %arg5[%c0_13, %c0_14] : memref<1x128xf32, #tpu.memory_space<vmem>>, vector<1x128xf32>
      %20 = vector.broadcast %19 : vector<1x128xf32> to vector<128x128xf32>
      %21 = arith.addf %18, %20 : vector<128x128xf32>
      %cst_15 = arith.constant 0.000000e+00 : f32
      %22 = vector.broadcast %cst_15 : f32 to vector<128x128xf32>
      %23 = arith.maximumf %21, %22 : vector<128x128xf32>
      %24 = arith.truncf %23 : vector<128x128xf32> to vector<128x128xbf16>
      %c0_16 = arith.constant 0 : index
      %c0_17 = arith.constant 0 : index
      %25 = vector.load %arg6[%c0_16, %c0_17] : memref<128x128xbf16, #tpu.memory_space<vmem>>, vector<128x128xbf16>
      %cst_18 = arith.constant dense<0.000000e+00> : vector<128x128xf32>
      %26 = tpu.matmul %24, %25, %cst_18 {dimension_numbers = #tpu.dot_dimension_numbers<[1], [0], [0], [1], [0, 0, 1, 1], [], []>} : vector<128x128xbf16>, vector<128x128xbf16>, vector<128x128xf32> -> vector<128x128xf32>
      %c0_19 = arith.constant 0 : index
      %c0_20 = arith.constant 0 : index
      %27 = vector.load %arg4[%c0_19, %c0_20] : memref<128x1xf32, #tpu.memory_space<vmem>>, vector<128x1xf32>
      %28 = vector.broadcast %27 : vector<128x1xf32> to vector<128x128xf32>
      %29 = arith.mulf %28, %26 : vector<128x128xf32>
      %30 = arith.truncf %29 : vector<128x128xf32> to vector<128x128xbf16>
      %c0_21 = arith.constant 0 : index
      %c0_22 = arith.constant 0 : index
      %31 = vector.load %arg7[%c0_21, %c0_22] : memref<128x128xbf16, #tpu.memory_space<vmem>>, vector<128x128xbf16>
      tpu.vector_store %arg7[%c0_21, %c0_22], %30 {strides = array<i32>} : memref<128x128xbf16, #tpu.memory_space<vmem>>, vector<128x128xbf16>,
    } else {
    }
    return
  }
  func.func @transform_0(%arg0: i32, %arg1: i32) -> (i32, i32) {
    %c0_i32 = arith.constant 0 : i32
    return %arg0, %arg1 : i32, i32
  }
  func.func @transform_1(%arg0: i32, %arg1: i32) -> (i32, i32) {
    %c0_i32 = arith.constant 0 : i32
    %c0_i32_0 = arith.constant 0 : i32
    %c0_i32_1 = arith.constant 0 : i32
    return %c0_i32, %c0_i32_0 : i32, i32
  }
  func.func @transform_2(%arg0: i32, %arg1: i32) -> (i32, i32) {
    %c0_i32 = arith.constant 0 : i32
    %c0_i32_0 = arith.constant 0 : i32
    return %arg0, %c0_i32 : i32, i32
  }
  func.func @transform_3(%arg0: i32, %arg1: i32) -> (i32, i32) {
    %c0_i32 = arith.constant 0 : i32
    %c0_i32_0 = arith.constant 0 : i32
    %c0_i32_1 = arith.constant 0 : i32
    return %c0_i32, %c0_i32_0 : i32, i32
  }
  func.func @transform_4(%arg0: i32, %arg1: i32) -> (i32, i32) {
    %c0_i32 = arith.constant 0 : i32
    %c0_i32_0 = arith.constant 0 : i32
    %c0_i32_1 = arith.constant 0 : i32
    return %c0_i32, %c0_i32_0 : i32, i32
  }
  func.func @transform_5(%arg0: i32, %arg1: i32) -> (i32, i32) {
    %c0_i32 = arith.constant 0 : i32
    %c0_i32_0 = arith.constant 0 : i32
    return %arg0, %c0_i32 : i32, i32
  }
}

</mosaic_0001>

<llo_original>
// kernel: tpu_custom_call.1
$region0: #{tpu_custom_call.1}
  #allocation0 [shape = 'u32[]', space=smem, size = 0x4, offset = 0x4, fixed_abs, tag = 'smem constant byte address 0x4 - core index']
  #allocation1 [shape = 'u32[144,128]{1,0:T(1,128)}', space=vmem, size = 0x12000, scoped, tag = 'internal scratch']
  #allocation2 [shape = 'f32[128,128]{1,0:T(8,128)}', space=vmem, size = 0x10000, scoped, tag = 'scratch operand']
  %s0 = inlined_call_operand.vmem [shape: bf16[128,128], index: 0, kind: input, shape index: {}]
  %s1 = inlined_call_operand.vmem [shape: bf16[128,128], index: 1, kind: input, shape index: {}]
  %s2 = inlined_call_operand.vmem [shape: f32[128,1], index: 2, kind: input, shape index: {}]
  %s3 = inlined_call_operand.vmem [shape: f32[1,128], index: 3, kind: input, shape index: {}]
  %s4 = inlined_call_operand.hbm [shape: bf16[128,128], index: 4, kind: input, shape index: {}]
  %s5 = inlined_call_operand.hbm [shape: bf16[128,128], index: 5, kind: output, shape index: {}]
  %s6 = sld [smem:[#allocation0]]
  $region42: #{tpu_custom_call.1} parent=0
    _
  %s8 = ssub.s32 1, %s6
  %s9 = scalar_select 0, %s8, %s6
  $region1: #{tpu_custom_call.1} parent=0
    #allocation3 [shape = 'u8[32768]{0}', space=vmem, size = 0x8000, scoped, tag = 'input window, operand 4, single buffered']
    #allocation4 [shape = 's32[1]{0}', space=sflag, size = 0x4, scoped, tag = 'scoped memory for tpu_custom_call.1']
    #allocation5 [shape = 's32[1]{0}', space=sflag, size = 0x4, scoped, tag = 'scoped memory for tpu_custom_call.1']
    #allocation6 [shape = 'u8[32768]{0}', space=vmem, size = 0x8000, scoped, tag = 'output window, operand 0, single buffered']
    %10 = vsyncpa [#allocation4], 0
    %11 = vsyncpa [#allocation5], 0
    // Predicated region
    $region2: #{tpu_custom_call.1} parent=1 // pred_check
      _
    $region3: #{tpu_custom_call.1} parent=1 // pred_check_branch
      %13 = sbr.rel (0) target = $region5
    $region4: #{tpu_custom_call.1} parent=1 // pred_region
      _
    $region5: #{tpu_custom_call.1} parent=1 // pred_fallthru
      _
    // Predicated region
    $region6: #{tpu_custom_call.1} parent=1 // pred_check
      _
    $region7: #{tpu_custom_call.1} parent=1 // pred_check_branch
      %15 = sbr.rel (0) target = $region9
    $region8: #{tpu_custom_call.1} parent=1 // pred_region
      _
    $region9: #{tpu_custom_call.1} parent=1 // pred_fallthru
      _
    // Predicated region
    $region10: #{tpu_custom_call.1} parent=1 // pred_check
      _
    $region11: #{tpu_custom_call.1} parent=1 // pred_check_branch
      %17 = sbr.rel (0) target = $region13
    $region12: #{tpu_custom_call.1} parent=1 // pred_region
      _
    $region13: #{tpu_custom_call.1} parent=1 // pred_fallthru
      _
    // Predicated region
    $region14: #{tpu_custom_call.1} parent=1 // pred_check
      _
    $region15: #{tpu_custom_call.1} parent=1 // pred_check_branch
      %19 = sbr.rel (0) target = $region17
    $region16: #{tpu_custom_call.1} parent=1 // pred_region
      _
    $region17: #{tpu_custom_call.1} parent=1 // pred_fallthru
      _
    // Predicated region
    $region18: #{tpu_custom_call.1} parent=1 // pred_check
      _
    $region19: #{tpu_custom_call.1} parent=1 // pred_check_branch
      %21 = sbr.rel (0) target = $region21
    $region20: #{tpu_custom_call.1} parent=1 // pred_region
      %s23 = ssub.s32 1024, 1024
      %24 = vsyncadd [#allocation4], %s23
      %s25 = sshll.u32 [#allocation3], 4
      %s26 = int_to_ptr.vmem [resolvable:$true] %s25
      %31 = dma.hbm_to_vmem [thread:$0]  %s4, 1024, %s26, [#allocation4], 64, 64, 4
    $region21: #{tpu_custom_call.1} parent=1 // pred_fallthru
      _
    // Predicated region
    $region22: #{tpu_custom_call.1} parent=1 // pred_check
      _
    $region23: #{tpu_custom_call.1} parent=1 // pred_check_branch
      %33 = sbr.rel (0) target = $region25
    $region24: #{tpu_custom_call.1} parent=1 // pred_region
      %34 = dma.done [#allocation4], 1024
    $region25: #{tpu_custom_call.1} parent=1 // pred_fallthru
      _
    %p36 = scmp.eq.s32.totalorder 0, 0
    // Predicated region
    $region26: #{tpu_custom_call.1} parent=1 // pred_check
      %p37 = pneg %p36
    $region27: #{tpu_custom_call.1} parent=1 // pred_check_branch
      %39 = sbr.rel (%p37) target = $region29
    $region28: #{tpu_custom_call.1} parent=1 // pred_region
      %40 = vst [vmem:[#allocation2] sm:$0xff] 0.0
      %41 = vst [vmem:[#allocation2 + $0x8] sm:$0xff] 0.0
      %42 = vst [vmem:[#allocation2 + $0x10] sm:$0xff] 0.0
      %43 = vst [vmem:[#allocation2 + $0x18] sm:$0xff] 0.0
      %44 = vst [vmem:[#allocation2 + $0x20] sm:$0xff] 0.0
      %45 = vst [vmem:[#allocation2 + $0x28] sm:$0xff] 0.0
      %46 = vst [vmem:[#allocation2 + $0x30] sm:$0xff] 0.0
      %47 = vst [vmem:[#allocation2 + $0x38] sm:$0xff] 0.0
      %48 = vst [vmem:[#allocation2 + $0x40] sm:$0xff] 0.0
      %49 = vst [vmem:[#allocation2 + $0x48] sm:$0xff] 0.0
      %50 = vst [vmem:[#allocation2 + $0x50] sm:$0xff] 0.0
      %51 = vst [vmem:[#allocation2 + $0x58] sm:$0xff] 0.0
      %52 = vst [vmem:[#allocation2 + $0x60] sm:$0xff] 0.0
      %53 = vst [vmem:[#allocation2 + $0x68] sm:$0xff] 0.0
      %54 = vst [vmem:[#allocation2 + $0x70] sm:$0xff] 0.0
      %55 = vst [vmem:[#allocation2 + $0x78] sm:$0xff] 0.0
    $region29: #{tpu_custom_call.1} parent=1 // pred_fallthru
      _
    %s56 = smul.u32 0, 128
    %s57 = sshra.s32 %s56, 3
    %s58 = sand.u32 %s56, 7
    %s59 = smul.addr %s57, 4
    %s60 = scalar_lea.vmem %s1, %s59
    %v61 = vld [vmem:[%s60] sm:$0xf]
    %v62 = vld [vmem:[%s60 + $0x4] sm:$0xf]
    %v63 = vld [vmem:[%s60 + $0x8] sm:$0xf]
    %v64 = vld [vmem:[%s60 + $0xc] sm:$0xf]
    %v65 = vld [vmem:[%s60 + $0x10] sm:$0xf]
    %v66 = vld [vmem:[%s60 + $0x14] sm:$0xf]
    %v67 = vld [vmem:[%s60 + $0x18] sm:$0xf]
    %v68 = vld [vmem:[%s60 + $0x1c] sm:$0xf]
    %v69 = vld [vmem:[%s60 + $0x20] sm:$0xf]
    %v70 = vld [vmem:[%s60 + $0x24] sm:$0xf]
    %v71 = vld [vmem:[%s60 + $0x28] sm:$0xf]
    %v72 = vld [vmem:[%s60 + $0x2c] sm:$0xf]
    %v73 = vld [vmem:[%s60 + $0x30] sm:$0xf]
    %v74 = vld [vmem:[%s60 + $0x34] sm:$0xf]
    %v75 = vld [vmem:[%s60 + $0x38] sm:$0xf]
    %v76 = vld [vmem:[%s60 + $0x3c] sm:$0xf]
    %v77 = vld [vmem:[#allocation2] sm:$0xff]
    %v78 = vld [vmem:[#allocation2 + $0x8] sm:$0xff]
    %v79 = vld [vmem:[#allocation2 + $0x10] sm:$0xff]
    %v80 = vld [vmem:[#allocation2 + $0x18] sm:$0xff]
    %v81 = vld [vmem:[#allocation2 + $0x20] sm:$0xff]
    %v82 = vld [vmem:[#allocation2 + $0x28] sm:$0xff]
    %v83 = vld [vmem:[#allocation2 + $0x30] sm:$0xff]
    %v84 = vld [vmem:[#allocation2 + $0x38] sm:$0xff]
    %v85 = vld [vmem:[#allocation2 + $0x40] sm:$0xff]
    %v86 = vld [vmem:[#allocation2 + $0x48] sm:$0xff]
    %v87 = vld [vmem:[#allocation2 + $0x50] sm:$0xff]
    %v88 = vld [vmem:[#allocation2 + $0x58] sm:$0xff]
    %v89 = vld [vmem:[#allocation2 + $0x60] sm:$0xff]
    %v90 = vld [vmem:[#allocation2 + $0x68] sm:$0xff]
    %v91 = vld [vmem:[#allocation2 + $0x70] sm:$0xff]
    %v92 = vld [vmem:[#allocation2 + $0x78] sm:$0xff]
    %v93 = vld [vmem:[%s0] sm:$0xf]
    %v94 = vld [vmem:[%s0 + $0x4] sm:$0xf]
    %v95 = vld [vmem:[%s0 + $0x8] sm:$0xf]
    %v96 = vld [vmem:[%s0 + $0xc] sm:$0xf]
    %v97 = vld [vmem:[%s0 + $0x10] sm:$0xf]
    %v98 = vld [vmem:[%s0 + $0x14] sm:$0xf]
    %v99 = vld [vmem:[%s0 + $0x18] sm:$0xf]
    %v100 = vld [vmem:[%s0 + $0x1c] sm:$0xf]
    %v101 = vld [vmem:[%s0 + $0x20] sm:$0xf]
    %v102 = vld [vmem:[%s0 + $0x24] sm:$0xf]
    %v103 = vld [vmem:[%s0 + $0x28] sm:$0xf]
    %v104 = vld [vmem:[%s0 + $0x2c] sm:$0xf]
    %v105 = vld [vmem:[%s0 + $0x30] sm:$0xf]
    %v106 = vld [vmem:[%s0 + $0x34] sm:$0xf]
    %v107 = vld [vmem:[%s0 + $0x38] sm:$0xf]
    %v108 = vld [vmem:[%s0 + $0x3c] sm:$0xf]
    %v125 = vunpack.c.l.b16 %v93
    %v126 = vunpack.c.l.b16 %v94
    %v127 = vunpack.c.l.b16 %v95
    %v128 = vunpack.c.l.b16 %v96
    %v129 = vunpack.c.l.b16 %v97
    %v130 = vunpack.c.l.b16 %v98
    %v131 = vunpack.c.l.b16 %v99
    %v132 = vunpack.c.l.b16 %v100
    %v133 = vunpack.c.l.b16 %v101
    %v134 = vunpack.c.l.b16 %v102
    %v135 = vunpack.c.l.b16 %v103
    %v136 = vunpack.c.l.b16 %v104
    %v137 = vunpack.c.l.b16 %v105
    %v138 = vunpack.c.l.b16 %v106
    %v139 = vunpack.c.l.b16 %v107
    %v140 = vunpack.c.l.b16 %v108
    %v141 = vpack.c.b16 %v126, %v125
    %v142 = vpack.c.b16 %v128, %v127
    %v143 = vpack.c.b16 %v130, %v129
    %v144 = vpack.c.b16 %v132, %v131
    %v145 = vpack.c.b16 %v134, %v133
    %v146 = vpack.c.b16 %v136, %v135
    %v147 = vpack.c.b16 %v138, %v137
    %v148 = vpack.c.b16 %v140, %v139
    %v173 = vunpack.c.l.b16 %v61
    %v174 = vunpack.c.l.b16 %v62
    %v175 = vunpack.c.l.b16 %v63
    %v176 = vunpack.c.l.b16 %v64
    %v177 = vunpack.c.l.b16 %v65
    %v178 = vunpack.c.l.b16 %v66
    %v179 = vunpack.c.l.b16 %v67
    %v180 = vunpack.c.l.b16 %v68
    %v181 = vunpack.c.l.b16 %v69
    %v182 = vunpack.c.l.b16 %v70
    %v183 = vunpack.c.l.b16 %v71
    %v184 = vunpack.c.l.b16 %v72
    %v185 = vunpack.c.l.b16 %v73
    %v186 = vunpack.c.l.b16 %v74
    %v187 = vunpack.c.l.b16 %v75
    %v188 = vunpack.c.l.b16 %v76
    %v189 = vpack.c.b16 %v174, %v173
    %v190 = vpack.c.b16 %v176, %v175
    %v191 = vpack.c.b16 %v178, %v177
    %v192 = vpack.c.b16 %v180, %v179
    %v193 = vpack.c.b16 %v182, %v181
    %v194 = vpack.c.b16 %v184, %v183
    %v195 = vpack.c.b16 %v186, %v185
    %v196 = vpack.c.b16 %v188, %v187
    %205 = vmatprep.subr.bf16.mxu0 0
    %206 = vmatpush1.bf16.msra.mxu0 %v196
    %207 = vmatprep.subr.bf16.mxu0 0
    %208 = vmatpush1.bf16.msra.mxu0 %v195
    %209 = vmatprep.subr.bf16.mxu0 0
    %210 = vmatpush1.bf16.msra.mxu0 %v194
    %211 = vmatprep.subr.bf16.mxu0 0
    %212 = vmatpush1.bf16.msra.mxu0 %v193
    %213 = vmatprep.subr.bf16.mxu0 0
    %214 = vmatpush1.bf16.msra.mxu0 %v192
    %215 = vmatprep.subr.bf16.mxu0 0
    %216 = vmatpush1.bf16.msra.mxu0 %v191
    %217 = vmatprep.subr.bf16.mxu0 0
    %218 = vmatpush1.bf16.msra.mxu0 %v190
    %219 = vmatprep.subr.bf16.mxu0 0
    %220 = vmatpush1.bf16.msra.mxu0 %v189
    %221 = vmatprep.subr.bf16.mxu0 0
    %222 = vmatpush2.bf16.msra.mxu0 0
    %223 = vmatprep.subr.bf16.mxu0 0
    %224 = vmatpush2.bf16.msra.mxu0 0
    %225 = vmatprep.subr.bf16.mxu0 0
    %226 = vmatpush2.bf16.msra.mxu0 0
    %227 = vmatprep.subr.bf16.mxu0 0
    %228 = vmatpush2.bf16.msra.mxu0 0
    %229 = vmatprep.subr.bf16.mxu0 0
    %230 = vmatpush2.bf16.msra.mxu0 0
    %231 = vmatprep.subr.bf16.mxu0 0
    %232 = vmatpush2.bf16.msra.mxu0 0
    %233 = vmatprep.subr.bf16.mxu0 0
    %234 = vmatpush2.bf16.msra.mxu0 0
    %235 = vmatprep.subr.bf16.mxu0 0
    %236 = vmatpush2.bf16.msra.mxu0 0
    %237 = vmatprep.mubr.bf16.mxu0 0
    %238 = vmatmul.mubr.bf16.gmra.mxu0 %v141
    %v239 = vpop.f32.mrf.mxu0
    %v240 = vadd.f32 0.0, %v239
    %v241 = vpop.f32.mrf.mxu0
    %v242 = vpop.f32.mrf.mxu0
    %v243 = vadd.f32 0.0, %v242
    %v244 = vpop.f32.mrf.mxu0
    %245 = vmatprep.mubr.bf16.mxu0 0
    %246 = vmatmul.mubr.bf16.gmra.mxu0 %v142
    %v247 = vpop.f32.mrf.mxu0
    %v248 = vadd.f32 0.0, %v247
    %v249 = vpop.f32.mrf.mxu0
    %v250 = vpop.f32.mrf.mxu0
    %v251 = vadd.f32 0.0, %v250
    %v252 = vpop.f32.mrf.mxu0
    %253 = vmatprep.mubr.bf16.mxu0 0
    %254 = vmatmul.mubr.bf16.gmra.mxu0 %v143
    %v255 = vpop.f32.mrf.mxu0
    %v256 = vadd.f32 0.0, %v255
    %v257 = vpop.f32.mrf.mxu0
    %v258 = vpop.f32.mrf.mxu0
    %v259 = vadd.f32 0.0, %v258
    %v260 = vpop.f32.mrf.mxu0
    %261 = vmatprep.mubr.bf16.mxu0 0
    %262 = vmatmul.mubr.bf16.gmra.mxu0 %v144
    %v263 = vpop.f32.mrf.mxu0
    %v264 = vadd.f32 0.0, %v263
    %v265 = vpop.f32.mrf.mxu0
    %v266 = vpop.f32.mrf.mxu0
    %v267 = vadd.f32 0.0, %v266
    %v268 = vpop.f32.mrf.mxu0
    %269 = vmatprep.mubr.bf16.mxu0 0
    %270 = vmatmul.mubr.bf16.gmra.mxu0 %v145
    %v271 = vpop.f32.mrf.mxu0
    %v272 = vadd.f32 0.0, %v271
    %v273 = vpop.f32.mrf.mxu0
    %v274 = vpop.f32.mrf.mxu0
    %v275 = vadd.f32 0.0, %v274
    %v276 = vpop.f32.mrf.mxu0
    %277 = vmatprep.mubr.bf16.mxu0 0
    %278 = vmatmul.mubr.bf16.gmra.mxu0 %v146
    %v279 = vpop.f32.mrf.mxu0
    %v280 = vadd.f32 0.0, %v279
    %v281 = vpop.f32.mrf.mxu0
    %v282 = vpop.f32.mrf.mxu0
    %v283 = vadd.f32 0.0, %v282
    %v284 = vpop.f32.mrf.mxu0
    %285 = vmatprep.mubr.bf16.mxu0 0
    %286 = vmatmul.mubr.bf16.gmra.mxu0 %v147
    %v287 = vpop.f32.mrf.mxu0
    %v288 = vadd.f32 0.0, %v287
    %v289 = vpop.f32.mrf.mxu0
    %v290 = vpop.f32.mrf.mxu0
    %v291 = vadd.f32 0.0, %v290
    %v292 = vpop.f32.mrf.mxu0
    %293 = vmatprep.mubr.bf16.mxu0 0
    %294 = vmatmul.mubr.bf16.gmra.mxu0 %v148
    %v295 = vpop.f32.mrf.mxu0
    %v296 = vadd.f32 0.0, %v295
    %v297 = vpop.f32.mrf.mxu0
    %v298 = vpop.f32.mrf.mxu0
    %v299 = vadd.f32 0.0, %v298
    %v300 = vpop.f32.mrf.mxu0
    %301 = vdwg.mxu0
    %v302 = vadd.f32 %v77, %v240
    %v303 = vadd.f32 %v78, %v243
    %v304 = vadd.f32 %v79, %v248
    %v305 = vadd.f32 %v80, %v251
    %v306 = vadd.f32 %v81, %v256
    %v307 = vadd.f32 %v82, %v259
    %v308 = vadd.f32 %v83, %v264
    %v309 = vadd.f32 %v84, %v267
    %v310 = vadd.f32 %v85, %v272
    %v311 = vadd.f32 %v86, %v275
    %v312 = vadd.f32 %v87, %v280
    %v313 = vadd.f32 %v88, %v283
    %v314 = vadd.f32 %v89, %v288
    %v315 = vadd.f32 %v90, %v291
    %v316 = vadd.f32 %v91, %v296
    %v317 = vadd.f32 %v92, %v299
    %318 = vst [vmem:[#allocation2] sm:$0xff] %v302
    %319 = vst [vmem:[#allocation2 + $0x8] sm:$0xff] %v303
    %320 = vst [vmem:[#allocation2 + $0x10] sm:$0xff] %v304
    %321 = vst [vmem:[#allocation2 + $0x18] sm:$0xff] %v305
    %322 = vst [vmem:[#allocation2 + $0x20] sm:$0xff] %v306
    %323 = vst [vmem:[#allocation2 + $0x28] sm:$0xff] %v307
    %324 = vst [vmem:[#allocation2 + $0x30] sm:$0xff] %v308
    %325 = vst [vmem:[#allocation2 + $0x38] sm:$0xff] %v309
    %326 = vst [vmem:[#allocation2 + $0x40] sm:$0xff] %v310
    %327 = vst [vmem:[#allocation2 + $0x48] sm:$0xff] %v311
    %328 = vst [vmem:[#allocation2 + $0x50] sm:$0xff] %v312
    %329 = vst [vmem:[#allocation2 + $0x58] sm:$0xff] %v313
    %330 = vst [vmem:[#allocation2 + $0x60] sm:$0xff] %v314
    %331 = vst [vmem:[#allocation2 + $0x68] sm:$0xff] %v315
    %332 = vst [vmem:[#allocation2 + $0x70] sm:$0xff] %v316
    %333 = vst [vmem:[#allocation2 + $0x78] sm:$0xff] %v317
    // Predicated region
    $region30: #{tpu_custom_call.1} parent=1 // pred_check
      %p334 = pneg %p36
    $region31: #{tpu_custom_call.1} parent=1 // pred_check_branch
      %336 = sbr.rel (%p334) target = $region33
    $region32: #{tpu_custom_call.1} parent=1 // pred_region
      %v337 = vld [vmem:[%s2] sm:$0xff]
      %v338 = vld [vmem:[%s2 + $0x8] sm:$0xff]
      %v339 = vld [vmem:[%s2 + $0x10] sm:$0xff]
      %v340 = vld [vmem:[%s2 + $0x18] sm:$0xff]
      %v341 = vld [vmem:[%s2 + $0x20] sm:$0xff]
      %v342 = vld [vmem:[%s2 + $0x28] sm:$0xff]
      %v343 = vld [vmem:[%s2 + $0x30] sm:$0xff]
      %v344 = vld [vmem:[%s2 + $0x38] sm:$0xff]
      %v345 = vld [vmem:[%s2 + $0x40] sm:$0xff]
      %v346 = vld [vmem:[%s2 + $0x48] sm:$0xff]
      %v347 = vld [vmem:[%s2 + $0x50] sm:$0xff]
      %v348 = vld [vmem:[%s2 + $0x58] sm:$0xff]
      %v349 = vld [vmem:[%s2 + $0x60] sm:$0xff]
      %v350 = vld [vmem:[%s2 + $0x68] sm:$0xff]
      %v351 = vld [vmem:[%s2 + $0x70] sm:$0xff]
      %v352 = vld [vmem:[%s2 + $0x78] sm:$0xff]
      %v353 = vld [vmem:[#allocation2] sm:$0xff]
      %v354 = vld [vmem:[#allocation2 + $0x8] sm:$0xff]
      %v355 = vld [vmem:[#allocation2 + $0x10] sm:$0xff]
      %v356 = vld [vmem:[#allocation2 + $0x18] sm:$0xff]
      %v357 = vld [vmem:[#allocation2 + $0x20] sm:$0xff]
      %v358 = vld [vmem:[#allocation2 + $0x28] sm:$0xff]
      %v359 = vld [vmem:[#allocation2 + $0x30] sm:$0xff]
      %v360 = vld [vmem:[#allocation2 + $0x38] sm:$0xff]
      %v361 = vld [vmem:[#allocation2 + $0x40] sm:$0xff]
      %v362 = vld [vmem:[#allocation2 + $0x48] sm:$0xff]
      %v363 = vld [vmem:[#allocation2 + $0x50] sm:$0xff]
      %v364 = vld [vmem:[#allocation2 + $0x58] sm:$0xff]
      %v365 = vld [vmem:[#allocation2 + $0x60] sm:$0xff]
      %v366 = vld [vmem:[#allocation2 + $0x68] sm:$0xff]
      %v367 = vld [vmem:[#allocation2 + $0x70] sm:$0xff]
      %v368 = vld [vmem:[#allocation2 + $0x78] sm:$0xff]
      %370 = vset.pattern.permute.xlu0 0
      %371 = vperm.xlu0 %370, %v337
      %v372 = vpop.permute.xlu0 %371
      %375 = vset.pattern.permute.xlu0 0
      %376 = vperm.xlu0 %375, %v338
      %v377 = vpop.permute.xlu0 %376
      %380 = vset.pattern.permute.xlu0 0
      %381 = vperm.xlu0 %380, %v339
      %v382 = vpop.permute.xlu0 %381
      %385 = vset.pattern.permute.xlu0 0
      %386 = vperm.xlu0 %385, %v340
      %v387 = vpop.permute.xlu0 %386
      %390 = vset.pattern.permute.xlu0 0
      %391 = vperm.xlu0 %390, %v341
      %v392 = vpop.permute.xlu0 %391
      %395 = vset.pattern.permute.xlu0 0
      %396 = vperm.xlu0 %395, %v342
      %v397 = vpop.permute.xlu0 %396
      %400 = vset.pattern.permute.xlu0 0
      %401 = vperm.xlu0 %400, %v343
      %v402 = vpop.permute.xlu0 %401
      %405 = vset.pattern.permute.xlu0 0
      %406 = vperm.xlu0 %405, %v344
      %v407 = vpop.permute.xlu0 %406
      %410 = vset.pattern.permute.xlu0 0
      %411 = vperm.xlu0 %410, %v345
      %v412 = vpop.permute.xlu0 %411
      %415 = vset.pattern.permute.xlu0 0
      %416 = vperm.xlu0 %415, %v346
      %v417 = vpop.permute.xlu0 %416
      %420 = vset.pattern.permute.xlu0 0
      %421 = vperm.xlu0 %420, %v347
      %v422 = vpop.permute.xlu0 %421
      %425 = vset.pattern.permute.xlu0 0
      %426 = vperm.xlu0 %425, %v348
      %v427 = vpop.permute.xlu0 %426
      %430 = vset.pattern.permute.xlu0 0
      %431 = vperm.xlu0 %430, %v349
      %v432 = vpop.permute.xlu0 %431
      %435 = vset.pattern.permute.xlu0 0
      %436 = vperm.xlu0 %435, %v350
      %v437 = vpop.permute.xlu0 %436
      %440 = vset.pattern.permute.xlu0 0
      %441 = vperm.xlu0 %440, %v351
      %v442 = vpop.permute.xlu0 %441
      %445 = vset.pattern.permute.xlu0 0
      %446 = vperm.xlu0 %445, %v352
      %v447 = vpop.permute.xlu0 %446
      %v449 = vmul.f32 %v372, %v353
      %v450 = vmul.f32 %v377, %v354
      %v451 = vmul.f32 %v382, %v355
      %v452 = vmul.f32 %v387, %v356
      %v453 = vmul.f32 %v392, %v357
      %v454 = vmul.f32 %v397, %v358
      %v455 = vmul.f32 %v402, %v359
      %v456 = vmul.f32 %v407, %v360
      %v457 = vmul.f32 %v412, %v361
      %v458 = vmul.f32 %v417, %v362
      %v459 = vmul.f32 %v422, %v363
      %v460 = vmul.f32 %v427, %v364
      %v461 = vmul.f32 %v432, %v365
      %v462 = vmul.f32 %v437, %v366
      %v463 = vmul.f32 %v442, %v367
      %v464 = vmul.f32 %v447, %v368
      %v465 = vld [vmem:[%s3] sm:$0x1]
      %v467 = vlaneseq
      %v468 = vshrl.u32 %v467, 7
      %v469 = vsub.s32 0, %v468
      %v470 = vrot.slane %v465, %v469
      %v472 = vadd.f32 %v449, %v470
      %v473 = vadd.f32 %v450, %v470
      %v474 = vadd.f32 %v451, %v470
      %v475 = vadd.f32 %v452, %v470
      %v476 = vadd.f32 %v453, %v470
      %v477 = vadd.f32 %v454, %v470
      %v478 = vadd.f32 %v455, %v470
      %v479 = vadd.f32 %v456, %v470
      %v480 = vadd.f32 %v457, %v470
      %v481 = vadd.f32 %v458, %v470
      %v482 = vadd.f32 %v459, %v470
      %v483 = vadd.f32 %v460, %v470
      %v484 = vadd.f32 %v461, %v470
      %v485 = vadd.f32 %v462, %v470
      %v486 = vadd.f32 %v463, %v470
      %v487 = vadd.f32 %v464, %v470
      %v488 = vmax.f32 %v472, 0.0
      %v489 = vmax.f32 %v473, 0.0
      %v490 = vmax.f32 %v474, 0.0
      %v491 = vmax.f32 %v475, 0.0
      %v492 = vmax.f32 %v476, 0.0
      %v493 = vmax.f32 %v477, 0.0
      %v494 = vmax.f32 %v478, 0.0
      %v495 = vmax.f32 %v479, 0.0
      %v496 = vmax.f32 %v480, 0.0
      %v497 = vmax.f32 %v481, 0.0
      %v498 = vmax.f32 %v482, 0.0
      %v499 = vmax.f32 %v483, 0.0
      %v500 = vmax.f32 %v484, 0.0
      %v501 = vmax.f32 %v485, 0.0
      %v502 = vmax.f32 %v486, 0.0
      %v503 = vmax.f32 %v487, 0.0
      %v504 = vpack.c.bf16 %v489, %v488
      %v505 = vpack.c.bf16 %v491, %v490
      %v506 = vpack.c.bf16 %v493, %v492
      %v507 = vpack.c.bf16 %v495, %v494
      %v508 = vpack.c.bf16 %v497, %v496
      %v509 = vpack.c.bf16 %v499, %v498
      %v510 = vpack.c.bf16 %v501, %v500
      %v511 = vpack.c.bf16 %v503, %v502
      %v512 = vld [vmem:[#allocation3] sm:$0xf]
      %v513 = vld [vmem:[#allocation3 + $0x4] sm:$0xf]
      %v514 = vld [vmem:[#allocation3 + $0x8] sm:$0xf]
      %v515 = vld [vmem:[#allocation3 + $0xc] sm:$0xf]
      %v516 = vld [vmem:[#allocation3 + $0x10] sm:$0xf]
      %v517 = vld [vmem:[#allocation3 + $0x14] sm:$0xf]
      %v518 = vld [vmem:[#allocation3 + $0x18] sm:$0xf]
      %v519 = vld [vmem:[#allocation3 + $0x1c] sm:$0xf]
      %v520 = vld [vmem:[#allocation3 + $0x20] sm:$0xf]
      %v521 = vld [vmem:[#allocation3 + $0x24] sm:$0xf]
      %v522 = vld [vmem:[#allocation3 + $0x28] sm:$0xf]
      %v523 = vld [vmem:[#allocation3 + $0x2c] sm:$0xf]
      %v524 = vld [vmem:[#allocation3 + $0x30] sm:$0xf]
      %v525 = vld [vmem:[#allocation3 + $0x34] sm:$0xf]
      %v526 = vld [vmem:[#allocation3 + $0x38] sm:$0xf]
      %v527 = vld [vmem:[#allocation3 + $0x3c] sm:$0xf]
      %v544 = vunpack.c.l.b16 %v512
      %v545 = vunpack.c.l.b16 %v513
      %v546 = vunpack.c.l.b16 %v514
      %v547 = vunpack.c.l.b16 %v515
      %v548 = vunpack.c.l.b16 %v516
      %v549 = vunpack.c.l.b16 %v517
      %v550 = vunpack.c.l.b16 %v518
      %v551 = vunpack.c.l.b16 %v519
      %v552 = vunpack.c.l.b16 %v520
      %v553 = vunpack.c.l.b16 %v521
      %v554 = vunpack.c.l.b16 %v522
      %v555 = vunpack.c.l.b16 %v523
      %v556 = vunpack.c.l.b16 %v524
      %v557 = vunpack.c.l.b16 %v525
      %v558 = vunpack.c.l.b16 %v526
      %v559 = vunpack.c.l.b16 %v527
      %v560 = vpack.c.b16 %v545, %v544
      %v561 = vpack.c.b16 %v547, %v546
      %v562 = vpack.c.b16 %v549, %v548
      %v563 = vpack.c.b16 %v551, %v550
      %v564 = vpack.c.b16 %v553, %v552
      %v565 = vpack.c.b16 %v555, %v554
      %v566 = vpack.c.b16 %v557, %v556
      %v567 = vpack.c.b16 %v559, %v558
      %576 = vmatprep.subr.bf16.mxu0 0
      %577 = vmatpush1.bf16.msra.mxu0 %v567
      %578 = vmatprep.subr.bf16.mxu0 0
      %579 = vmatpush1.bf16.msra.mxu0 %v566
      %580 = vmatprep.subr.bf16.mxu0 0
      %581 = vmatpush1.bf16.msra.mxu0 %v565
      %582 = vmatprep.subr.bf16.mxu0 0
      %583 = vmatpush1.bf16.msra.mxu0 %v564
      %584 = vmatprep.subr.bf16.mxu0 0
      %585 = vmatpush1.bf16.msra.mxu0 %v563
      %586 = vmatprep.subr.bf16.mxu0 0
      %587 = vmatpush1.bf16.msra.mxu0 %v562
      %588 = vmatprep.subr.bf16.mxu0 0
      %589 = vmatpush1.bf16.msra.mxu0 %v561
      %590 = vmatprep.subr.bf16.mxu0 0
      %591 = vmatpush1.bf16.msra.mxu0 %v560
      %592 = vmatprep.subr.bf16.mxu0 0
      %593 = vmatpush2.bf16.msra.mxu0 0
      %594 = vmatprep.subr.bf16.mxu0 0
      %595 = vmatpush2.bf16.msra.mxu0 0
      %596 = vmatprep.subr.bf16.mxu0 0
      %597 = vmatpush2.bf16.msra.mxu0 0
      %598 = vmatprep.subr.bf16.mxu0 0
      %599 = vmatpush2.bf16.msra.mxu0 0
      %600 = vmatprep.subr.bf16.mxu0 0
      %601 = vmatpush2.bf16.msra.mxu0 0
      %602 = vmatprep.subr.bf16.mxu0 0
      %603 = vmatpush2.bf16.msra.mxu0 0
      %604 = vmatprep.subr.bf16.mxu0 0
      %605 = vmatpush2.bf16.msra.mxu0 0
      %606 = vmatprep.subr.bf16.mxu0 0
      %607 = vmatpush2.bf16.msra.mxu0 0
      %608 = vmatprep.mubr.bf16.mxu0 0
      %609 = vmatmul.mubr.bf16.gmra.mxu0 %v504
      %v610 = vpop.f32.mrf.mxu0
      %v611 = vadd.f32 0.0, %v610
      %v612 = vpop.f32.mrf.mxu0
      %v613 = vpop.f32.mrf.mxu0
      %v614 = vadd.f32 0.0, %v613
      %v615 = vpop.f32.mrf.mxu0
      %616 = vmatprep.mubr.bf16.mxu0 0
      %617 = vmatmul.mubr.bf16.gmra.mxu0 %v505
      %v618 = vpop.f32.mrf.mxu0
      %v619 = vadd.f32 0.0, %v618
      %v620 = vpop.f32.mrf.mxu0
      %v621 = vpop.f32.mrf.mxu0
      %v622 = vadd.f32 0.0, %v621
      %v623 = vpop.f32.mrf.mxu0
      %624 = vmatprep.mubr.bf16.mxu0 0
      %625 = vmatmul.mubr.bf16.gmra.mxu0 %v506
      %v626 = vpop.f32.mrf.mxu0
      %v627 = vadd.f32 0.0, %v626
      %v628 = vpop.f32.mrf.mxu0
      %v629 = vpop.f32.mrf.mxu0
      %v630 = vadd.f32 0.0, %v629
      %v631 = vpop.f32.mrf.mxu0
      %632 = vmatprep.mubr.bf16.mxu0 0
      %633 = vmatmul.mubr.bf16.gmra.mxu0 %v507
      %v634 = vpop.f32.mrf.mxu0
      %v635 = vadd.f32 0.0, %v634
      %v636 = vpop.f32.mrf.mxu0
      %v637 = vpop.f32.mrf.mxu0
      %v638 = vadd.f32 0.0, %v637
      %v639 = vpop.f32.mrf.mxu0
      %640 = vmatprep.mubr.bf16.mxu0 0
      %641 = vmatmul.mubr.bf16.gmra.mxu0 %v508
      %v642 = vpop.f32.mrf.mxu0
      %v643 = vadd.f32 0.0, %v642
      %v644 = vpop.f32.mrf.mxu0
      %v645 = vpop.f32.mrf.mxu0
      %v646 = vadd.f32 0.0, %v645
      %v647 = vpop.f32.mrf.mxu0
      %648 = vmatprep.mubr.bf16.mxu0 0
      %649 = vmatmul.mubr.bf16.gmra.mxu0 %v509
      %v650 = vpop.f32.mrf.mxu0
      %v651 = vadd.f32 0.0, %v650
      %v652 = vpop.f32.mrf.mxu0
      %v653 = vpop.f32.mrf.mxu0
      %v654 = vadd.f32 0.0, %v653
      %v655 = vpop.f32.mrf.mxu0
      %656 = vmatprep.mubr.bf16.mxu0 0
      %657 = vmatmul.mubr.bf16.gmra.mxu0 %v510
      %v658 = vpop.f32.mrf.mxu0
      %v659 = vadd.f32 0.0, %v658
      %v660 = vpop.f32.mrf.mxu0
      %v661 = vpop.f32.mrf.mxu0
      %v662 = vadd.f32 0.0, %v661
      %v663 = vpop.f32.mrf.mxu0
      %664 = vmatprep.mubr.bf16.mxu0 0
      %665 = vmatmul.mubr.bf16.gmra.mxu0 %v511
      %v666 = vpop.f32.mrf.mxu0
      %v667 = vadd.f32 0.0, %v666
      %v668 = vpop.f32.mrf.mxu0
      %v669 = vpop.f32.mrf.mxu0
      %v670 = vadd.f32 0.0, %v669
      %v671 = vpop.f32.mrf.mxu0
      %672 = vdwg.mxu0
      %v673 = vmul.f32 %v372, %v611
      %v674 = vmul.f32 %v377, %v614
      %v675 = vmul.f32 %v382, %v619
      %v676 = vmul.f32 %v387, %v622
      %v677 = vmul.f32 %v392, %v627
      %v678 = vmul.f32 %v397, %v630
      %v679 = vmul.f32 %v402, %v635
      %v680 = vmul.f32 %v407, %v638
      %v681 = vmul.f32 %v412, %v643
      %v682 = vmul.f32 %v417, %v646
      %v683 = vmul.f32 %v422, %v651
      %v684 = vmul.f32 %v427, %v654
      %v685 = vmul.f32 %v432, %v659
      %v686 = vmul.f32 %v437, %v662
      %v687 = vmul.f32 %v442, %v667
      %v688 = vmul.f32 %v447, %v670
      %v689 = vpack.c.bf16 %v674, %v673
      %v690 = vpack.c.bf16 %v676, %v675
      %v691 = vpack.c.bf16 %v678, %v677
      %v692 = vpack.c.bf16 %v680, %v679
      %v693 = vpack.c.bf16 %v682, %v681
      %v694 = vpack.c.bf16 %v684, %v683
      %v695 = vpack.c.bf16 %v686, %v685
      %v696 = vpack.c.bf16 %v688, %v687
      %v705 = vunpack.c.l.b16 %v689
      %v706 = vunpack.c.h.b16 %v689
      %v707 = vunpack.c.l.b16 %v690
      %v708 = vunpack.c.h.b16 %v690
      %v709 = vunpack.c.l.b16 %v691
      %v710 = vunpack.c.h.b16 %v691
      %v711 = vunpack.c.l.b16 %v692
      %v712 = vunpack.c.h.b16 %v692
      %v713 = vunpack.c.l.b16 %v693
      %v714 = vunpack.c.h.b16 %v693
      %v715 = vunpack.c.l.b16 %v694
      %v716 = vunpack.c.h.b16 %v694
      %v717 = vunpack.c.l.b16 %v695
      %v718 = vunpack.c.h.b16 %v695
      %v719 = vunpack.c.l.b16 %v696
      %v720 = vunpack.c.h.b16 %v696
      %v721 = vpack.c.b16 %v705, %v705
      %v722 = vpack.c.b16 %v706, %v706
      %v723 = vpack.c.b16 %v707, %v707
      %v724 = vpack.c.b16 %v708, %v708
      %v725 = vpack.c.b16 %v709, %v709
      %v726 = vpack.c.b16 %v710, %v710
      %v727 = vpack.c.b16 %v711, %v711
      %v728 = vpack.c.b16 %v712, %v712
      %v729 = vpack.c.b16 %v713, %v713
      %v730 = vpack.c.b16 %v714, %v714
      %v731 = vpack.c.b16 %v715, %v715
      %v732 = vpack.c.b16 %v716, %v716
      %v733 = vpack.c.b16 %v717, %v717
      %v734 = vpack.c.b16 %v718, %v718
      %v735 = vpack.c.b16 %v719, %v719
      %v736 = vpack.c.b16 %v720, %v720
      %753 = vst [vmem:[#allocation6] sm:$0xf] %v721
      %754 = vst [vmem:[#allocation6 + $0x4] sm:$0xf] %v722
      %755 = vst [vmem:[#allocation6 + $0x8] sm:$0xf] %v723
      %756 = vst [vmem:[#allocation6 + $0xc] sm:$0xf] %v724
      %757 = vst [vmem:[#allocation6 + $0x10] sm:$0xf] %v725
      %758 = vst [vmem:[#allocation6 + $0x14] sm:$0xf] %v726
      %759 = vst [vmem:[#allocation6 + $0x18] sm:$0xf] %v727
      %760 = vst [vmem:[#allocation6 + $0x1c] sm:$0xf] %v728
      %761 = vst [vmem:[#allocation6 + $0x20] sm:$0xf] %v729
      %762 = vst [vmem:[#allocation6 + $0x24] sm:$0xf] %v730
      %763 = vst [vmem:[#allocation6 + $0x28] sm:$0xf] %v731
      %764 = vst [vmem:[#allocation6 + $0x2c] sm:$0xf] %v732
      %765 = vst [vmem:[#allocation6 + $0x30] sm:$0xf] %v733
      %766 = vst [vmem:[#allocation6 + $0x34] sm:$0xf] %v734
      %767 = vst [vmem:[#allocation6 + $0x38] sm:$0xf] %v735
      %768 = vst [vmem:[#allocation6 + $0x3c] sm:$0xf] %v736
    $region33: #{tpu_custom_call.1} parent=1 // pred_fallthru
      _
    // Predicated region
    $region34: #{tpu_custom_call.1} parent=1 // pred_check
      _
    $region35: #{tpu_custom_call.1} parent=1 // pred_check_branch
      %770 = sbr.rel (0) target = $region37
    $region36: #{tpu_custom_call.1} parent=1 // pred_region
      %s772 = ssub.s32 1024, 1024
      %773 = vsyncadd [#allocation5], %s772
      %s774 = sshll.u32 [#allocation6], 4
      %s775 = int_to_ptr.vmem [resolvable:$true] %s774
      %780 = dma.vmem_to_hbm [thread:$0]  %s775, 1024, %s5, [#allocation5], 64, 64, 4
    $region37: #{tpu_custom_call.1} parent=1 // pred_fallthru
      _
    // Predicated region
    $region38: #{tpu_custom_call.1} parent=1 // pred_check
      _
    $region39: #{tpu_custom_call.1} parent=1 // pred_check_branch
      %782 = sbr.rel (0) target = $region41
    $region40: #{tpu_custom_call.1} parent=1 // pred_region
      %783 = dma.done [#allocation5], 1024
    $region41: #{tpu_custom_call.1} parent=1 // pred_fallthru
      _
    %784 = vsyncpa [#allocation4], 1
    %785 = vsyncpa [#allocation5], 1

</llo_original>
